<compile_context>
chip_gen: v7x
topology: tpu7x:2x2x1
jax: 0.10.0
libtpu: 0.0.40
codegen_flags: <defaults>
</compile_context>

<pallas_src>
import functools

import jax
import jax.numpy as jnp
from jax.experimental import pallas as pl
from jax.experimental.pallas import tpu as pltpu

EPS = 1e-5  # nn.InstanceNorm2d default eps


# ---------------------------------------------------------------------------
# Kernels
# ---------------------------------------------------------------------------
def _adain_kernel_cf(x_ref, style_ref, o_ref, *, tc, apply_dtype):
    """Channel-first: x/o blocks are (tc, HW) with HW lane-dense.

    style_ref is the resident (C, 2) [scale|shift] table of the current
    sample; the channel tile is selected with an aligned dynamic sublane slice.
    """
    start = pl.multiple_of(pl.program_id(1) * tc, tc)
    st = style_ref[pl.ds(start, tc), :]                       # (tc, 2) f32
    scale = st[:, 0:1]                                        # (tc, 1)
    shift = st[:, 1:2]                                        # (tc, 1)

    x = x_ref[...]                                            # (tc, HW) native dtype
    inv_hw = 1.0 / x.shape[-1]

    # Pivoted single-pass stats: subtracting a per-channel pivot (first spatial
    # element) avoids E[x^2] - mean^2 cancellation for non-zero-centered inputs.
    pivot = x[:, 0:1]                                         # (tc, 1) native
    xd = x - pivot                                            # native dtype slab
    mean_d = jnp.sum(xd, axis=-1, keepdims=True, dtype=jnp.float32) * inv_hw
    var = (jnp.sum(xd * xd, axis=-1, keepdims=True, dtype=jnp.float32) * inv_hw
           - mean_d * mean_d)
    inv_std = jax.lax.rsqrt(var + EPS)                        # (tc, 1) f32

    # Fold normalization + affine into out = a*x + b (2 VPU ops / element).
    a = scale * inv_std
    b = shift - a * (pivot.astype(jnp.float32) + mean_d)
    a = a.astype(apply_dtype)
    b = b.astype(apply_dtype)
    o_ref[...] = (a * x.astype(apply_dtype) + b).astype(o_ref.dtype)


def _adain_kernel_cl(x_ref, style_ref, o_ref, *, apply_dtype):
    """Channel-last: x/o blocks are (HW, tc) with channels lane-dense."""
    st = style_ref[...]                                       # (2, tc) f32
    scale = st[0:1, :]                                        # (1, tc)
    shift = st[1:2, :]

    x = x_ref[...]                                            # (HW, tc) native dtype
    inv_hw = 1.0 / x.shape[0]
    pivot = x[0:1, :]                                         # (1, tc)
    xd = x - pivot
    mean_d = jnp.sum(xd, axis=0, keepdims=True, dtype=jnp.float32) * inv_hw
    var = (jnp.sum(xd * xd, axis=0, keepdims=True, dtype=jnp.float32) * inv_hw
           - mean_d * mean_d)
    inv_std = jax.lax.rsqrt(var + EPS)

    a = scale * inv_std
    b = shift - a * (pivot.astype(jnp.float32) + mean_d)
    a = a.astype(apply_dtype)
    b = b.astype(apply_dtype)
    o_ref[...] = (a * x.astype(apply_dtype) + b).astype(o_ref.dtype)


# ---------------------------------------------------------------------------
# Tiling / chip-generation heuristics
# ---------------------------------------------------------------------------
def _chip_params():
    """Per-TPU-generation per-step slab budget / scoped-VMEM limit (bytes)."""
    kind = ""
    try:
        kind = jax.devices()[0].device_kind.lower()
    except Exception:
        pass
    if "v7" in kind or "tpu7" in kind:
        # 64 MiB physical VMEM, ~3.2 TB/s HBM: bigger slabs + explicit limit.
        return {"slab_budget": 6 << 20, "vmem_limit": 48 << 20, "bf16_apply": True}
    if "v6" in kind:
        # 128 MiB physical VMEM, ~1.4 TB/s HBM.
        return {"slab_budget": 8 << 20, "vmem_limit": 64 << 20, "bf16_apply": True}
    if "v5e" in kind or "v5 lite" in kind or "v5lite" in kind:
        # 16 MiB scoped-VMEM default: keep 2 MiB slabs (<10% step overhead at
        # ~820 GB/s) and only raise the limit when forced to (huge HW).
        return {"slab_budget": 2 << 20, "vmem_limit": None, "bf16_apply": False}
    if "v2" in kind or "v3" in kind:
        return {"slab_budget": 1 << 20, "vmem_limit": None, "bf16_apply": False}
    # Unknown / other generations (v4, v5p, ...): middle-of-the-road settings.
    return {"slab_budget": 4 << 20, "vmem_limit": 48 << 20, "bf16_apply": True}


def _pick_tile(C, HW, itemsize, budget_bytes, N, align):
    """Largest channel tile that (a) divides C, (b) is `align`-aligned or the
    full channel dim (never violates the (8,128)-or-full-dim tiling rule) and
    (c) keeps the per-step slab within `budget_bytes`.  Falls back to the
    smallest aligned tile if nothing fits, and shrinks (when possible) so the
    grid has >= 2 steps to keep both v7x TensorCores busy."""
    valid = [d for d in range(1, C + 1)
             if C % d == 0 and (d % align == 0 or d == C)]
    fitting = [d for d in valid if d * HW * itemsize <= budget_bytes]
    tc = max(fitting) if fitting else min(valid)
    if N * (C // tc) < 2:
        smaller = [d for d in valid if d < tc and N * (C // d) >= 2]
        if smaller:
            tc = max(smaller)
    return tc


def _vmem_limit_bytes(chip_limit, slab_elems, itemsize, style_buf_bytes):
    needed = (4 * slab_elems * itemsize   # double-buffered input + output blocks
              + 2 * slab_elems * 4        # in-kernel f32-class temporaries
              + style_buf_bytes           # resident / blocked style buffers
              + (2 << 20))                # slack for compiler scratch
    if chip_limit is None:
        # Leave the chip's scoped-VMEM default alone unless forced past it.
        return needed if needed > (15 << 20) else None
    return max(chip_limit, needed)


# ---------------------------------------------------------------------------
# Public wrapper
# ---------------------------------------------------------------------------
def adain(image, w, ws, bs, wb, bb):
    """AdaIN forward.  image: (N, C, H, W); w: (N, w_dim);
    ws/wb: (C, w_dim); bs/bb: (C,).  Matches the PyTorch module."""
    N, C, H, W = image.shape
    HW = H * W
    itemsize = jnp.dtype(image.dtype).itemsize
    chip = _chip_params()

    # ---- Style affine hoisted out of the kernel: one batched XLA matmul.
    w_cat = jnp.concatenate([ws, wb], axis=0)                       # (2C, w_dim)
    b_cat = jnp.concatenate([bs, bb], axis=0)                       # (2C,)
    style = (jnp.dot(w, w_cat.T, preferred_element_type=jnp.float32)
             + b_cat.astype(jnp.float32))                           # (N, 2C) f32
    scale, shift = style[:, :C], style[:, C:]                       # (N, C) each

    apply_dtype = (jnp.bfloat16
                   if (chip["bf16_apply"] and image.dtype == jnp.bfloat16)
                   else jnp.float32)

    # Channel-last layout when the spatial extent cannot fill the 128-lane axis
    # but the channel count can (early StyleGAN layers: HW=16/64, C>=128).
    channel_last = (HW < 128) and (C % 128 == 0)

    if not channel_last:
        # ---- channel-first path (HW lane-dense) ----------------------------
        tc = _pick_tile(C, HW, itemsize, chip["slab_budget"], N, align=8)
        style_cf = jnp.stack([scale, shift], axis=-1)               # (N, C, 2)
        img = image.reshape(N, C, HW)
        style_buf = 2 * (-(-C // 8)) * 4096                         # padded VMEM bufs
        vmem_limit = _vmem_limit_bytes(chip["vmem_limit"], tc * HW, itemsize,
                                       style_buf)
        # TODO(synk): add a spatially-tiled two-pass variant (sum/sumsq carry)
        # for HW so large that even the smallest aligned channel tile exceeds
        # physical VMEM.
        kernel = functools.partial(_adain_kernel_cf, tc=tc,
                                   apply_dtype=apply_dtype)
        out = pl.pallas_call(
            kernel,
            out_shape=jax.ShapeDtypeStruct((N, C, HW), image.dtype),
            grid_spec=pltpu.PrefetchScalarGridSpec(
                num_scalar_prefetch=0,
                grid=(N, C // tc),
                in_specs=[
                    pl.BlockSpec((None, tc, HW), lambda n, c: (n, c, 0)),
                    # Resident per-sample style table: block index constant
                    # over the channel-tile axis, so it is DMA'd once per n.
                    pl.BlockSpec((None, C, 2), lambda n, c: (n, 0, 0)),
                ],
                out_specs=pl.BlockSpec((None, tc, HW), lambda n, c: (n, c, 0)),
            ),
            compiler_params=pltpu.CompilerParams(
                dimension_semantics=("parallel", "parallel"),
                vmem_limit_bytes=vmem_limit),
        )(img, style_cf)
        return out.reshape(N, C, H, W)

    # ---- channel-last path (channels lane-dense) ---------------------------
    tc = _pick_tile(C, HW, itemsize, chip["slab_budget"], N, align=128)
    style_cl = jnp.stack([scale, shift], axis=1)                    # (N, 2, C)
    img = image.reshape(N, C, HW).transpose(0, 2, 1)                # (N, HW, C)
    style_buf = 2 * (-(-C // 128)) * 4096
    vmem_limit = _vmem_limit_bytes(chip["vmem_limit"], tc * HW, itemsize,
                                   style_buf)
    kernel = functools.partial(_adain_kernel_cl, apply_dtype=apply_dtype)
    out = pl.pallas_call(
        kernel,
        out_shape=jax.ShapeDtypeStruct((N, HW, C), image.dtype),
        grid_spec=pltpu.PrefetchScalarGridSpec(
            num_scalar_prefetch=0,
            grid=(N, C // tc),
            in_specs=[
                pl.BlockSpec((None, HW, tc), lambda n, c: (n, 0, c)),
                pl.BlockSpec((None, 2, tc), lambda n, c: (n, 0, c)),
            ],
            out_specs=pl.BlockSpec((None, HW, tc), lambda n, c: (n, 0, c)),
        ),
        compiler_params=pltpu.CompilerParams(
            dimension_semantics=("parallel", "parallel"),
            vmem_limit_bytes=vmem_limit),
    )(img, style_cl)
    return out.transpose(0, 2, 1).reshape(N, C, H, W)


# ---------------------------------------------------------------------------
# Reference + self-test
# ---------------------------------------------------------------------------
def adain_reference(image, w, ws, bs, wb, bb):
    mean = jnp.mean(image, axis=(2, 3), keepdims=True)
    var = jnp.mean((image - mean) ** 2, axis=(2, 3), keepdims=True)
    normed = (image - mean) * jax.lax.rsqrt(var + EPS)
    scale = (w @ ws.T + bs)[:, :, None, None]
    shift = (w @ wb.T + bb)[:, :, None, None]
    return scale * normed + shift


def _make_inputs(key, N, C, H, W, w_dim, dtype=jnp.float32):
    k_img, k_w, k_ws, k_bs, k_wb, k_bb = jax.random.split(key, 6)
    image = jax.random.normal(k_img, (N, C, H, W), dtype=dtype)
    w = jax.random.normal(k_w, (N, w_dim), dtype=dtype)
    bound = 1.0 / (w_dim ** 0.5)                # PyTorch Linear default init bound
    ws = jax.random.uniform(k_ws, (C, w_dim), jnp.float32, -bound, bound)
    bs = jax.random.uniform(k_bs, (C,), jnp.float32, -bound, bound)
    wb = jax.random.uniform(k_wb, (C, w_dim), jnp.float32, -bound, bound)
    bb = jax.random.uniform(k_bb, (C,), jnp.float32, -bound, bound)
    return image, w, ws, bs, wb, bb


if __name__ == "__main__":
    k0, k1, k2 = jax.random.split(jax.random.PRNGKey(0), 3)

    # Primary: small shapes implied by the module (channel-first path).
    args = _make_inputs(k0, N=2, C=4, H=16, W=16, w_dim=32)
    out = adain(*args)
    jax.block_until_ready(out)
    ref = adain_reference(*args)
    assert out.shape == ref.shape and out.dtype == ref.dtype
    assert jnp.allclose(out, ref, atol=1e-4, rtol=1e-4), "channel-first mismatch"

    # Channel-tiled + megacore-split channel-first path (N=1 -> 2 grid steps).
    args = _make_inputs(k1, N=1, C=32, H=16, W=16, w_dim=32)
    out = adain(*args)
    jax.block_until_ready(out)
    assert jnp.allclose(out, adain_reference(*args), atol=1e-4, rtol=1e-4), \
        "tiled channel-first mismatch"

    # Small-spatial / wide-channel StyleGAN layer (channel-last path).
    args = _make_inputs(k2, N=2, C=128, H=4, W=4, w_dim=32)
    out = adain(*args)
    jax.block_until_ready(out)
    assert jnp.allclose(out, adain_reference(*args), atol=1e-4, rtol=1e-4), \
        "channel-last mismatch"

    print("KERNEL_OK")
</pallas_src>

<mosaic_0001>
module attributes {stable_mosaic.version = 11 : i64} {
  func.func @_adain_kernel_cf(%arg0: i32, %arg1: i32, %arg2: memref<1x4x256xf32, #tpu.memory_space<vmem>>, %arg3: memref<1x4x2xf32, #tpu.memory_space<vmem>>, %arg4: memref<1x4x256xf32, #tpu.memory_space<vmem>>) attributes {dimension_semantics = [#tpu.dimension_semantics<parallel>, #tpu.dimension_semantics<parallel>], iteration_bounds = array<i64: 2, 1>, scalar_prefetch = 0 : i64, scratch_operands = 0 : i64, tpu.core_type = #tpu.core_type<tc>, window_params = [{transform_indices = @transform_0, window_bounds = array<i64: 1, 4, 256>}, {transform_indices = @transform_1, window_bounds = array<i64: 1, 4, 2>}, {transform_indices = @transform_2, window_bounds = array<i64: 1, 4, 256>}]} {
    %c4_i32 = arith.constant 4 : i32
    %0 = arith.muli %arg1, %c4_i32 : i32
    %1 = tpu.assume_multiple %0, 4 : i32
    %c0 = arith.constant 0 : index
    %2 = arith.index_cast %1 : i32 to index
    %c0_0 = arith.constant 0 : index
    %3 = vector.load %arg3[%c0, %2, %c0_0] : memref<1x4x2xf32, #tpu.memory_space<vmem>>, vector<1x4x2xf32>
    %4 = vector.shape_cast %3 : vector<1x4x2xf32> to vector<4x2xf32>
    %5 = vector.extract_strided_slice %4 {offsets = [0, 0], sizes = [4, 1], strides = [1, 1]} : vector<4x2xf32> to vector<4x1xf32>
    %6 = vector.extract_strided_slice %4 {offsets = [0, 1], sizes = [4, 1], strides = [1, 1]} : vector<4x2xf32> to vector<4x1xf32>
    %c0_1 = arith.constant 0 : index
    %c0_2 = arith.constant 0 : index
    %c0_3 = arith.constant 0 : index
    %7 = vector.load %arg2[%c0_1, %c0_2, %c0_3] : memref<1x4x256xf32, #tpu.memory_space<vmem>>, vector<1x4x256xf32>
    %8 = vector.shape_cast %7 : vector<1x4x256xf32> to vector<4x256xf32>
    %9 = vector.extract_strided_slice %8 {offsets = [0, 0], sizes = [4, 1], strides = [1, 1]} : vector<4x256xf32> to vector<4x1xf32>
    %10 = vector.broadcast %9 : vector<4x1xf32> to vector<4x256xf32>
    %11 = arith.subf %8, %10 : vector<4x256xf32>
    %cst = arith.constant dense<0.000000e+00> : vector<4xf32>
    %12 = vector.multi_reduction <add>, %11, %cst [1] : vector<4x256xf32> to vector<4xf32>
    %13 = vector.shape_cast %12 : vector<4xf32> to vector<4x1xf32>
    %cst_4 = arith.constant 3.906250e-03 : f32
    %14 = vector.broadcast %cst_4 : f32 to vector<4x1xf32>
    %15 = arith.mulf %13, %14 : vector<4x1xf32>
    %16 = arith.mulf %11, %11 : vector<4x256xf32>
    %cst_5 = arith.constant dense<0.000000e+00> : vector<4xf32>
    %17 = vector.multi_reduction <add>, %16, %cst_5 [1] : vector<4x256xf32> to vector<4xf32>
    %18 = vector.shape_cast %17 : vector<4xf32> to vector<4x1xf32>
    %cst_6 = arith.constant 3.906250e-03 : f32
    %19 = vector.broadcast %cst_6 : f32 to vector<4x1xf32>
    %20 = arith.mulf %18, %19 : vector<4x1xf32>
    %21 = arith.mulf %15, %15 : vector<4x1xf32>
    %22 = arith.subf %20, %21 : vector<4x1xf32>
    %cst_7 = arith.constant 9.99999974E-6 : f32
    %23 = vector.broadcast %cst_7 : f32 to vector<4x1xf32>
    %24 = arith.addf %22, %23 : vector<4x1xf32>
    %25 = math.rsqrt %24 : vector<4x1xf32>
    %26 = arith.mulf %5, %25 : vector<4x1xf32>
    %27 = arith.addf %9, %15 : vector<4x1xf32>
    %28 = arith.mulf %26, %27 : vector<4x1xf32>
    %29 = arith.subf %6, %28 : vector<4x1xf32>
    %30 = vector.broadcast %26 : vector<4x1xf32> to vector<4x256xf32>
    %31 = arith.mulf %30, %8 : vector<4x256xf32>
    %32 = vector.broadcast %29 : vector<4x1xf32> to vector<4x256xf32>
    %33 = arith.addf %31, %32 : vector<4x256xf32>
    %c0_8 = arith.constant 0 : index
    %c0_9 = arith.constant 0 : index
    %c0_10 = arith.constant 0 : index
    %34 = vector.load %arg4[%c0_8, %c0_9, %c0_10] : memref<1x4x256xf32, #tpu.memory_space<vmem>>, vector<1x4x256xf32>
    %35 = vector.shape_cast %34 : vector<1x4x256xf32> to vector<4x256xf32>
    %36 = vector.shape_cast %33 : vector<4x256xf32> to vector<1x4x256xf32>
    tpu.vector_store %arg4[%c0_8, %c0_9, %c0_10], %36 {strides = array<i32>} : memref<1x4x256xf32, #tpu.memory_space<vmem>>, vector<1x4x256xf32>,
    return
  }
  func.func @transform_0(%arg0: i32, %arg1: i32) -> (i32, i32, i32) {
    %c0_i32 = arith.constant 0 : i32
    %c0_i32_0 = arith.constant 0 : i32
    return %arg0, %arg1, %c0_i32 : i32, i32, i32
  }
  func.func @transform_1(%arg0: i32, %arg1: i32) -> (i32, i32, i32) {
    %c0_i32 = arith.constant 0 : i32
    %c0_i32_0 = arith.constant 0 : i32
    %c0_i32_1 = arith.constant 0 : i32
    return %arg0, %c0_i32, %c0_i32_0 : i32, i32, i32
  }
  func.func @transform_2(%arg0: i32, %arg1: i32) -> (i32, i32, i32) {
    %c0_i32 = arith.constant 0 : i32
    %c0_i32_0 = arith.constant 0 : i32
    return %arg0, %arg1, %c0_i32 : i32, i32, i32
  }
}

</mosaic_0001>

<llo_original>
// kernel: tpu_custom_call.1
$region0: #{tpu_custom_call.1}
  #allocation0 [shape = 'u32[]', space=smem, size = 0x4, offset = 0x4, fixed_abs, tag = 'smem constant byte address 0x4 - core index']
  #allocation1 [shape = 'u32[144,128]{1,0:T(1,128)}', space=vmem, size = 0x12000, scoped, tag = 'internal scratch']
  %s0 = inlined_call_operand.hbm [shape: f32[2,4,256], index: 0, kind: input, shape index: {}]
  %s1 = inlined_call_operand.vmem [shape: f32[2,4,2], index: 1, kind: input, shape index: {}]
  %s2 = inlined_call_operand.hbm [shape: f32[2,4,256], index: 2, kind: output, shape index: {}]
  %s3 = sld [smem:[#allocation0]]
  $region45: #{tpu_custom_call.1} parent=0
    _
  %s5 = ssub.s32 1, %s3
  %s6 = scalar_select 0, %s5, %s3
  $region1: #{tpu_custom_call.1} parent=0
    #allocation2 [shape = 'u8[8192]{0}', space=vmem, size = 0x2000, scoped, tag = 'input window, operand 0']
    #allocation3 [shape = 's32[2]{0}', space=sflag, size = 0x8, scoped, tag = 'scoped memory for tpu_custom_call.1']
    #allocation4 [shape = 's32[2]{0}', space=sflag, size = 0x8, scoped, tag = 'scoped memory for tpu_custom_call.1']
    #allocation5 [shape = 'u8[8192]{0}', space=vmem, size = 0x2000, scoped, tag = 'output window, operand 0']
    %7 = vsyncpa [#allocation3], 0
    %s8 = scalar_lea.sflag [#allocation3], 1
    %9 = vsyncpa %s8, 0
    %10 = vsyncpa [#allocation4], 0
    %s11 = scalar_lea.sflag [#allocation4], 1
    %12 = vsyncpa %s11, 0
    loop: start=0, step=1, limit=4
    $region2: #{tpu_custom_call.1} parent=1 // loop_pre_header
      _
    $region3: #{tpu_custom_call.1} parent=1 // loop_header
      %s14 = sphi 0, %s18
      %p15 = scmp.ge.s32.totalorder %s14, 4
      %s21 = sphi 0, %s33
      %s22 = sphi 0, %s29
      %s23 = sphi 0, %s21
      %s24 = sphi 0, %s22
      %s25 = sphi 0, %s23
      %s26 = sphi 0, %s24
      %s38 = sphi 0, %s40
      %s41 = sphi 0, %s38
      %s42 = sphi 0, %s41
      %s58 = sphi 0, %s42
      %s64 = sphi 0, %s66
      %s67 = sphi 0, %s64
      %s68 = sphi 0, %s67
      %s84 = sphi 0, %s68
      %s92 = sphi 0, %s94
      %s95 = sphi 0, %s92
      %s96 = sphi 0, %s95
      %s112 = sphi 0, %s96
    $region4: #{tpu_custom_call.1} parent=1 // loop_header_branch
      %17 = sbr.rel (%p15) target = $region8
    $region5: #{tpu_custom_call.1} parent=1 // loop_body
      %s19 = ssub.s32 %s14, 1
      %s20 = ssub.s32 %s14, 2
      %s27 = sadd.s32 1, %s22
      %p28 = scmp.ge.s32.totalorder %s27, 1
      %s29 = scalar_select %p28, 0, %s27
      %s30 = sadd.s32 1, %s21
      %s31 = scalar_select %p28, %s30, %s21
      %p32 = scmp.ge.s32.totalorder %s31, 2
      %s33 = scalar_select %p32, 0, %s31
      %s34 = ssub.s32 %s21, %s33
      %s35 = ssub.s32 %s22, %s29
      %s36 = sor.u32 %s34, %s35
      %p37 = scmp.eq.s32.totalorder %s36, 0
      %s39 = sadd.s32 %s38, 1
      %s40 = scalar_select %p37, %s38, %s39
      %p43 = pneg %p37
      %p44 = scmp.eq.s32.totalorder %s14, 1
      %p45 = por %p43, %p44
      %p46 = scmp.ne.s32.totalorder %s38, %s41
      %p47 = scmp.eq.s32.totalorder %s14, 0
      %p48 = por %p46, %p47
      %p49 = scmp.ne.s32.totalorder %s38, %s41
      %p50 = scmp.eq.s32.totalorder %s19, 1
      %p51 = por %p49, %p50
      %p52 = scmp.ne.s32.totalorder %s41, %s42
      %p53 = scmp.eq.s32.totalorder %s19, 0
      %p54 = por %p52, %p53
      %p55 = scmp.ne.s32.totalorder %s41, %s42
      %p56 = scmp.eq.s32.totalorder %s20, 1
      %p57 = por %p55, %p56
      %p59 = scmp.ne.s32.totalorder %s42, %s58
      %p60 = scmp.eq.s32.totalorder %s20, 0
      %p61 = por %p59, %p60
      %s62 = ssub.s32 %s21, %s33
      %p63 = scmp.eq.s32.totalorder %s62, 0
      %s65 = sadd.s32 %s64, 1
      %s66 = scalar_select %p63, %s64, %s65
      %p69 = pneg %p63
      %p70 = scmp.eq.s32.totalorder %s14, 1
      %p71 = por %p69, %p70
      %p72 = scmp.ne.s32.totalorder %s64, %s67
      %p73 = scmp.eq.s32.totalorder %s14, 0
      %p74 = por %p72, %p73
      %p75 = scmp.ne.s32.totalorder %s64, %s67
      %p76 = scmp.eq.s32.totalorder %s19, 1
      %p77 = por %p75, %p76
      %p78 = scmp.ne.s32.totalorder %s67, %s68
      %p79 = scmp.eq.s32.totalorder %s19, 0
      %p80 = por %p78, %p79
      %p81 = scmp.ne.s32.totalorder %s67, %s68
      %p82 = scmp.eq.s32.totalorder %s20, 1
      %p83 = por %p81, %p82
      %p85 = scmp.ne.s32.totalorder %s68, %s84
      %p86 = scmp.eq.s32.totalorder %s20, 0
      %p87 = por %p85, %p86
      %s88 = ssub.s32 %s21, %s33
      %s89 = ssub.s32 %s22, %s29
      %s90 = sor.u32 %s88, %s89
      %p91 = scmp.eq.s32.totalorder %s90, 0
      %s93 = sadd.s32 %s92, 1
      %s94 = scalar_select %p91, %s92, %s93
      %p97 = pneg %p91
      %p98 = scmp.eq.s32.totalorder %s14, 1
      %p99 = por %p97, %p98
      %p100 = scmp.ne.s32.totalorder %s92, %s95
      %p101 = scmp.eq.s32.totalorder %s14, 0
      %p102 = por %p100, %p101
      %p103 = scmp.ne.s32.totalorder %s92, %s95
      %p104 = scmp.eq.s32.totalorder %s19, 1
      %p105 = por %p103, %p104
      %p106 = scmp.ne.s32.totalorder %s95, %s96
      %p107 = scmp.eq.s32.totalorder %s19, 0
      %p108 = por %p106, %p107
      %p109 = scmp.ne.s32.totalorder %s95, %s96
      %p110 = scmp.eq.s32.totalorder %s20, 1
      %p111 = por %p109, %p110
      %p113 = scmp.ne.s32.totalorder %s96, %s112
      %p114 = scmp.eq.s32.totalorder %s20, 0
      %p115 = por %p113, %p114
      %p116 = scmp.le.s32.totalorder 1, %s14
      %p117 = scmp.lt.s32.totalorder %s14, 3
      %p118 = pnand %p116, %p117
      %p119 = pneg %p118
      // Predicated region
      $region9: #{tpu_custom_call.1} parent=5 // pred_check
        _
      $region10: #{tpu_custom_call.1} parent=5 // pred_check_branch
        %121 = sbr.rel (%p118) target = $region12
      $region11: #{tpu_custom_call.1} parent=5 // pred_region
        %s122 = ssub.s32 %s14, 1
      $region12: #{tpu_custom_call.1} parent=5 // pred_fallthru
        _
      %p123 = scmp.lt.s32.totalorder %s14, 2
      // Predicated region
      $region13: #{tpu_custom_call.1} parent=5 // pred_check
        %p124 = pneg %p123
      $region14: #{tpu_custom_call.1} parent=5 // pred_check_branch
        %126 = sbr.rel (%p124) target = $region16
      $region15: #{tpu_custom_call.1} parent=5 // pred_region
        // Predicated region
        $region17: #{tpu_custom_call.1} parent=15 // pred_check
          %p127 = pneg %p48
        $region18: #{tpu_custom_call.1} parent=15 // pred_check_branch
          %129 = sbr.rel (%p127) target = $region20
        $region19: #{tpu_custom_call.1} parent=15 // pred_region
          %s130 = sand.u32 %s38, 1
          %s131 = scalar_lea.sflag [#allocation3], %s130
          %s132 = sand.u32 %s38, 1
          %s133 = smul.addr %s132, 8
          %s134 = scalar_lea.vmem [#allocation2], %s133
          %s136 = ssub.s32 128, 128
          %137 = vsyncadd %s131, %s136
          %s138 = smul.addr %s22, 2
          %s139 = smul.addr %s21, 2
          %s140 = sadd.s32 %s138, %s139
          %s141 = smul.addr %s140, 64
          %s142 = scalar_lea.hbm %s0, %s141
          %s144 = sshll.u32 %s134, 4
          %s145 = int_to_ptr.vmem [resolvable:$true] %s144
          %147 = dma.hbm_to_vmem [thread:$0]  %s142, 128, %s145, %s131
        $region20: #{tpu_custom_call.1} parent=15 // pred_fallthru
          _
        // Predicated region
        $region21: #{tpu_custom_call.1} parent=15 // pred_check
          %p148 = pneg %p74
        $region22: #{tpu_custom_call.1} parent=15 // pred_check_branch
          %150 = sbr.rel (%p148) target = $region24
        $region23: #{tpu_custom_call.1} parent=15 // pred_region
          %p151 = scmp.lt.s32.totalorder %s21, 1
          %s152 = scalar_select %p151, %s21, 1
          %s153 = smul.addr %s152, 4
          %s154 = scalar_lea.vmem %s1, %s153
        $region24: #{tpu_custom_call.1} parent=15 // pred_fallthru
          _
      $region16: #{tpu_custom_call.1} parent=5 // pred_fallthru
        _
      %p155 = scmp.le.s32.totalorder 1, %s14
      %p156 = scmp.lt.s32.totalorder %s14, 3
      %p157 = pnand %p155, %p156
      %p158 = pneg %p157
      // Predicated region
      $region25: #{tpu_custom_call.1} parent=5 // pred_check
        _
      $region26: #{tpu_custom_call.1} parent=5 // pred_check_branch
        %160 = sbr.rel (%p157) target = $region28
      $region27: #{tpu_custom_call.1} parent=5 // pred_region
        %s161 = ssub.s32 %s14, 1
        %s162 = sand.u32 %s41, 1
        %s163 = scalar_lea.sflag [#allocation3], %s162
        %s164 = sand.u32 %s41, 1
        %s165 = smul.addr %s164, 8
        %s166 = scalar_lea.vmem [#allocation2], %s165
        // Predicated region
        $region29: #{tpu_custom_call.1} parent=27 // pred_check
          %p167 = pneg %p54
        $region30: #{tpu_custom_call.1} parent=27 // pred_check_branch
          %169 = sbr.rel (%p167) target = $region32
        $region31: #{tpu_custom_call.1} parent=27 // pred_region
          %170 = dma.done %s163, 128
        $region32: #{tpu_custom_call.1} parent=27 // pred_fallthru
          _
        %s171 = sand.u32 %s41, 1
        %s172 = scalar_lea.sflag [#allocation3], %s171
        %s173 = sand.u32 %s41, 1
        %s174 = smul.addr %s173, 8
        %s175 = scalar_lea.vmem [#allocation2], %s174
        %p176 = pneg %p54
        %p177 = pneg %p51
        %p178 = scmp.lt.s32.totalorder %s23, 1
        %s179 = scalar_select %p178, %s23, 1
        %s180 = smul.addr %s179, 4
        %s181 = scalar_lea.vmem %s1, %s180
        %p182 = pneg %p80
        %p183 = pneg %p77
        %p184 = pneg %p108
        %p185 = pneg %p105
        %s186 = sand.u32 %s95, 1
        %s187 = scalar_lea.sflag [#allocation4], %s186
        %s188 = sand.u32 %s95, 1
        %s189 = smul.addr %s188, 8
        %s190 = scalar_lea.vmem [#allocation5], %s189
        %p191 = scmp.lt.s32.totalorder %s23, 1
        %s192 = scalar_select %p191, %s23, 1
        %s193 = smul.addr %s192, 4
        %s194 = scalar_lea.vmem %s1, %s193
        %s195 = smul.u32 %s24, 4
        %s196 = scalar_lea.vmem %s194, %s195
        %v197 = vld [vmem:[%s196] sm:$0xf]
        %v198 = vld [vmem:[%s166] sm:$0xff]
        %200 = vset.pattern.permute.xlu0 0
        %201 = vperm.xlu0 %200, %v198
        %v202 = vpop.permute.xlu0 %201
        %v205 = vunpack.c.l.s4 839922192
        %v206 = vunpack.c.0.s8 %v205
        %v207 = vlaneseq
        %v208 = vshrl.u32 %v207, 7
        %v209 = vsub.s32 %v206, %v208
        %v210 = vrot.slane %v202, %v209
        %v211 = vsub.f32 %v198, %v210
        %v213 = vcombine.high %v211, %v211
        %vm215 = vcmask 1043456
        %v216 = vsel %vm215, %v211, 0.0
        %v217 = vsel %vm215, %v213, 0.0
        %v218 = vadd.f32 %v216, %v217
        %219 = vadd.xlane.f32.xlu0 %v218
        %v220 = vpop.xlane.xlu0 %219
        %v221 = vmul.f32 %v220, 0.00390625
        %v222 = vmul.f32 %v211, %v211
        %v224 = vcombine.high %v222, %v222
        %v226 = vsel %vm215, %v222, 0.0
        %v227 = vsel %vm215, %v224, 0.0
        %v228 = vadd.f32 %v226, %v227
        %229 = vadd.xlane.f32.xlu0 %v228
        %v230 = vpop.xlane.xlu0 %229
        %v231 = vmul.f32 %v230, 0.00390625
        %v232 = vmul.f32 %v221, %v221
        %v233 = vsub.f32 %v231, %v232
        %v234 = vadd.f32 %v233, 1e-05
        %v235 = vrsqrt.pop %v234
        %v236 = vmul.f32 %v197, %v235
        %v237 = vadd.f32 %v198, %v221
        %v238 = vmul.f32 %v236, %v237
        %240 = vrot.lane.b32.xlu0 %v238, 1
        %v241 = vpop.permute.xlu0 %240
        %v243 = vsub.f32 %v197, %v241
        %245 = vset.pattern.permute.xlu0 0
        %246 = vperm.xlu0 %245, %v236
        %v247 = vpop.permute.xlu0 %246
        %v249 = vcombine.high %v198, %v198
        %v251 = vmul.f32 %v247, %v198
        %v252 = vmul.f32 %v247, %v249
        %254 = vset.pattern.permute.xlu0 1
        %255 = vperm.xlu0 %254, %v243
        %v256 = vpop.permute.xlu0 %255
        %v258 = vadd.f32 %v251, %v256
        %v259 = vadd.f32 %v252, %v256
        %v262 = vcombine.low %v258, %v259
        %264 = vst [vmem:[%s190] sm:$0xff] %v262
        %s265 = sand.u32 %s95, 1
        %s266 = scalar_lea.sflag [#allocation4], %s265
        %s267 = sand.u32 %s95, 1
        %s268 = smul.addr %s267, 8
        %s269 = scalar_lea.vmem [#allocation5], %s268
        // Predicated region
        $region33: #{tpu_custom_call.1} parent=27 // pred_check
          %p270 = pneg %p105
        $region34: #{tpu_custom_call.1} parent=27 // pred_check_branch
          %272 = sbr.rel (%p270) target = $region36
        $region35: #{tpu_custom_call.1} parent=27 // pred_region
          %s274 = ssub.s32 128, 128
          %275 = vsyncadd %s266, %s274
          %s276 = smul.addr %s24, 2
          %s277 = smul.addr %s23, 2
          %s278 = sadd.s32 %s276, %s277
          %s279 = smul.addr %s278, 64
          %s280 = scalar_lea.hbm %s2, %s279
          %s282 = sshll.u32 %s269, 4
          %s283 = int_to_ptr.vmem [resolvable:$true] %s282
          %285 = dma.vmem_to_hbm [thread:$0]  %s283, 128, %s280, %s266
        $region36: #{tpu_custom_call.1} parent=27 // pred_fallthru
          _
      $region28: #{tpu_custom_call.1} parent=5 // pred_fallthru
        _
      %p286 = scmp.le.s32.totalorder 2, %s14
      // Predicated region
      $region37: #{tpu_custom_call.1} parent=5 // pred_check
        %p287 = pneg %p286
      $region38: #{tpu_custom_call.1} parent=5 // pred_check_branch
        %289 = sbr.rel (%p287) target = $region40
      $region39: #{tpu_custom_call.1} parent=5 // pred_region
        %s290 = ssub.s32 %s14, 2
        // Predicated region
        $region41: #{tpu_custom_call.1} parent=39 // pred_check
          %p291 = pneg %p111
        $region42: #{tpu_custom_call.1} parent=39 // pred_check_branch
          %293 = sbr.rel (%p291) target = $region44
        $region43: #{tpu_custom_call.1} parent=39 // pred_region
          %s294 = sand.u32 %s96, 1
          %s295 = scalar_lea.sflag [#allocation4], %s294
          %s296 = sand.u32 %s96, 1
          %s297 = smul.addr %s296, 8
          %s298 = scalar_lea.vmem [#allocation5], %s297
          %299 = dma.done %s295, 128
        $region44: #{tpu_custom_call.1} parent=39 // pred_fallthru
          _
      $region40: #{tpu_custom_call.1} parent=5 // pred_fallthru
        _
    $region6: #{tpu_custom_call.1} parent=1 // loop_footer
      %s18 = sadd.s32 1, %s14
    $region7: #{tpu_custom_call.1} parent=1 // loop_footer_branch
      %13 = sbr.rel target = $region3
    $region8: #{tpu_custom_call.1} parent=1 // loop_exit
      _
    %300 = vsyncpa [#allocation3], 1
    %s301 = scalar_lea.sflag [#allocation3], 1
    %302 = vsyncpa %s301, 1
    %303 = vsyncpa [#allocation4], 1
    %s304 = scalar_lea.sflag [#allocation4], 1
    %305 = vsyncpa %s304, 1

</llo_original>
